<compile_context>
chip_gen: v7x
topology: tpu7x:2x2x1
jax: 0.10.0
libtpu: 0.0.40
codegen_flags: <defaults>
</compile_context>

<pallas_src>
import jax
import jax.numpy as jnp
from jax.experimental import pallas as pl
from jax.experimental.pallas import tpu as pltpu

IN_FEATURES = 128
OUT_FEATURES = 384


def linear_add_relu_kernel(x1_ref, w_ref, b_ref, x2_ref, o_ref):
    # MXU matmul (bf16 inputs, f32 accumulate) + bias + residual add + relu (VPU).
    v1 = jnp.dot(x1_ref[...], w_ref[...], preferred_element_type=jnp.float32)
    v2 = v1 + b_ref[...] + x2_ref[...]
    o_ref[...] = jnp.maximum(v2, 0.0).astype(o_ref.dtype)


def _round_up(x, m):
    return ((x + m - 1) // m) * m


def linear_add_relu(x1, w_t, b, x2, *, tm=256):
    """x1: (B, IN) f32, w_t: (IN, OUT) f32, b: (1, OUT) f32, x2: (B, OUT) f32 -> (B, OUT) f32."""
    B = x1.shape[0]
    # Tile the batch; TM a multiple of 16 (bf16 sublane packing), no larger than needed.
    tm = min(tm, _round_up(B, 16))
    Bp = _round_up(B, tm)
    if Bp != B:
        pad = Bp - B
        x1 = jnp.pad(x1, ((0, pad), (0, 0)))
        x2 = jnp.pad(x2, ((0, pad), (0, 0)))

    # bf16 matmul operands: halves HBM traffic and uses the native bf16 MXU path.
    x1_bf = x1.astype(jnp.bfloat16)
    w_bf = w_t.astype(jnp.bfloat16)

    grid = (Bp // tm,)
    bytes_accessed = (
        x1_bf.size * 2           # bf16 activations
        + w_bf.size * 2          # bf16 weights
        + b.size * 4             # f32 bias
        + x2.size * 4            # f32 residual
        + Bp * OUT_FEATURES * 4  # f32 output
    )

    out = pl.pallas_call(
        linear_add_relu_kernel,
        out_shape=jax.ShapeDtypeStruct((Bp, OUT_FEATURES), jnp.float32),
        grid=grid,
        in_specs=[
            pl.BlockSpec((tm, IN_FEATURES), lambda i: (i, 0)),               # x1 tile
            pl.BlockSpec((IN_FEATURES, OUT_FEATURES), lambda i: (0, 0)),     # W^T resident
            pl.BlockSpec((1, OUT_FEATURES), lambda i: (0, 0)),               # bias resident
            pl.BlockSpec((tm, OUT_FEATURES), lambda i: (i, 0)),              # x2 tile
        ],
        out_specs=pl.BlockSpec((tm, OUT_FEATURES), lambda i: (i, 0)),
        compiler_params=pltpu.CompilerParams(
            dimension_semantics=("parallel",),      # shard batch tiles across TCs (v7x megacore)
            vmem_limit_bytes=32 * 1024 * 1024,      # explicit cap; safe on v5e/v6e/v7x
        ),
        cost_estimate=pl.CostEstimate(
            flops=2 * Bp * IN_FEATURES * OUT_FEATURES,
            transcendentals=0,
            bytes_accessed=bytes_accessed,
        ),
    )(x1_bf, w_bf, b, x2)
    return out[:B]


if __name__ == "__main__":
    key = jax.random.PRNGKey(0)
    k_x1, k_x2, k_w, k_b = jax.random.split(key, 4)

    # Small batch; deliberately NOT a multiple of the tile to exercise the
    # padding path, and > one tile so the grid actually pipelines.
    B = 40
    TM = 16

    x1 = jax.random.normal(k_x1, (B, IN_FEATURES), dtype=jnp.float32)
    x2 = jax.random.normal(k_x2, (B, OUT_FEATURES), dtype=jnp.float32)

    # Deterministic parameter init (mimics nn.Linear uniform(-1/sqrt(in), 1/sqrt(in)))
    bound = 1.0 / jnp.sqrt(jnp.float32(IN_FEATURES))
    w = jax.random.uniform(k_w, (OUT_FEATURES, IN_FEATURES), jnp.float32, -bound, bound)
    b = jax.random.uniform(k_b, (OUT_FEATURES,), jnp.float32, -bound, bound)

    w_t = w.T                       # (IN, OUT) for the kernel (row-major matmul)
    b2d = b.reshape(1, OUT_FEATURES)

    out = linear_add_relu(x1, w_t, b2d, x2, tm=TM)
    out = jax.block_until_ready(out)

    # Reference check in plain JAX (f32); bf16 matmul inputs => loosened tolerance.
    ref = jnp.maximum(x1 @ w.T + b + x2, 0.0)
    assert out.shape == (B, OUT_FEATURES)
    assert jnp.allclose(out, ref, atol=5e-2, rtol=5e-2), float(jnp.max(jnp.abs(out - ref)))

    print("KERNEL_OK")
</pallas_src>

<mosaic_0001>
module attributes {stable_mosaic.version = 11 : i64} {
  func.func @linear_add_relu_kernel(%arg0: i32, %arg1: memref<16x128xbf16, #tpu.memory_space<vmem>>, %arg2: memref<128x384xbf16, #tpu.memory_space<vmem>>, %arg3: memref<1x384xf32, #tpu.memory_space<vmem>>, %arg4: memref<16x384xf32, #tpu.memory_space<vmem>>, %arg5: memref<16x384xf32, #tpu.memory_space<vmem>>) attributes {dimension_semantics = [#tpu.dimension_semantics<parallel>], iteration_bounds = array<i64: 3>, scalar_prefetch = 0 : i64, scratch_operands = 0 : i64, tpu.core_type = #tpu.core_type<tc>, window_params = [{transform_indices = @transform_0, window_bounds = array<i64: 16, 128>}, {pipeline_mode = #tpu.pipeline_mode<synchronous>, transform_indices = @transform_1, window_bounds = array<i64: 128, 384>}, {pipeline_mode = #tpu.pipeline_mode<synchronous>, transform_indices = @transform_2, window_bounds = array<i64: 1, 384>}, {transform_indices = @transform_3, window_bounds = array<i64: 16, 384>}, {transform_indices = @transform_4, window_bounds = array<i64: 16, 384>}]} {
    %c0 = arith.constant 0 : index
    %c0_0 = arith.constant 0 : index
    %0 = vector.load %arg1[%c0, %c0_0] : memref<16x128xbf16, #tpu.memory_space<vmem>>, vector<16x128xbf16>
    %c0_1 = arith.constant 0 : index
    %c0_2 = arith.constant 0 : index
    %1 = vector.load %arg2[%c0_1, %c0_2] : memref<128x384xbf16, #tpu.memory_space<vmem>>, vector<128x384xbf16>
    %cst = arith.constant dense<0.000000e+00> : vector<16x384xf32>
    %2 = tpu.matmul %0, %1, %cst {dimension_numbers = #tpu.dot_dimension_numbers<[1], [0], [0], [1], [0, 0, 1, 1], [], []>} : vector<16x128xbf16>, vector<128x384xbf16>, vector<16x384xf32> -> vector<16x384xf32>
    %c0_3 = arith.constant 0 : index
    %c0_4 = arith.constant 0 : index
    %3 = vector.load %arg3[%c0_3, %c0_4] : memref<1x384xf32, #tpu.memory_space<vmem>>, vector<1x384xf32>
    %4 = vector.broadcast %3 : vector<1x384xf32> to vector<16x384xf32>
    %5 = arith.addf %2, %4 : vector<16x384xf32>
    %c0_5 = arith.constant 0 : index
    %c0_6 = arith.constant 0 : index
    %6 = vector.load %arg4[%c0_5, %c0_6] : memref<16x384xf32, #tpu.memory_space<vmem>>, vector<16x384xf32>
    %7 = arith.addf %5, %6 : vector<16x384xf32>
    %cst_7 = arith.constant 0.000000e+00 : f32
    %8 = vector.broadcast %cst_7 : f32 to vector<16x384xf32>
    %9 = arith.maximumf %7, %8 : vector<16x384xf32>
    %c0_8 = arith.constant 0 : index
    %c0_9 = arith.constant 0 : index
    %10 = vector.load %arg5[%c0_8, %c0_9] : memref<16x384xf32, #tpu.memory_space<vmem>>, vector<16x384xf32>
    tpu.vector_store %arg5[%c0_8, %c0_9], %9 {strides = array<i32>} : memref<16x384xf32, #tpu.memory_space<vmem>>, vector<16x384xf32>,
    return
  }
  func.func @transform_0(%arg0: i32) -> (i32, i32) {
    %c0_i32 = arith.constant 0 : i32
    %c0_i32_0 = arith.constant 0 : i32
    return %arg0, %c0_i32 : i32, i32
  }
  func.func @transform_1(%arg0: i32) -> (i32, i32) {
    %c0_i32 = arith.constant 0 : i32
    %c0_i32_0 = arith.constant 0 : i32
    %c0_i32_1 = arith.constant 0 : i32
    return %c0_i32, %c0_i32_0 : i32, i32
  }
  func.func @transform_2(%arg0: i32) -> (i32, i32) {
    %c0_i32 = arith.constant 0 : i32
    %c0_i32_0 = arith.constant 0 : i32
    %c0_i32_1 = arith.constant 0 : i32
    return %c0_i32, %c0_i32_0 : i32, i32
  }
  func.func @transform_3(%arg0: i32) -> (i32, i32) {
    %c0_i32 = arith.constant 0 : i32
    %c0_i32_0 = arith.constant 0 : i32
    return %arg0, %c0_i32 : i32, i32
  }
  func.func @transform_4(%arg0: i32) -> (i32, i32) {
    %c0_i32 = arith.constant 0 : i32
    %c0_i32_0 = arith.constant 0 : i32
    return %arg0, %c0_i32 : i32, i32
  }
}

</mosaic_0001>

<llo_original>
// kernel: tpu_custom_call.1
$region0: #{tpu_custom_call.1}
  #allocation0 [shape = 'u32[]', space=smem, size = 0x4, offset = 0x4, fixed_abs, tag = 'smem constant byte address 0x4 - core index']
  #allocation1 [shape = 'u32[144,128]{1,0:T(1,128)}', space=vmem, size = 0x12000, scoped, tag = 'internal scratch']
  %s0 = inlined_call_operand.hbm [shape: bf16[48,128], index: 0, kind: input, shape index: {}]
  %s1 = inlined_call_operand.hbm [shape: bf16[128,384], index: 1, kind: input, shape index: {}]
  %s2 = inlined_call_operand.vmem [shape: f32[1,384], index: 2, kind: input, shape index: {}]
  %s3 = inlined_call_operand.hbm [shape: f32[48,384], index: 3, kind: input, shape index: {}]
  %s4 = inlined_call_operand.hbm [shape: f32[48,384], index: 4, kind: output, shape index: {}]
  %s5 = sld [smem:[#allocation0]]
  $region61: #{tpu_custom_call.1} parent=0
    _
  %s7 = ssub.s32 1, %s5
  %s8 = scalar_select 0, %s7, %s5
  $region1: #{tpu_custom_call.1} parent=0
    #allocation2 [shape = 'u8[8192]{0}', space=vmem, size = 0x2000, scoped, tag = 'input window, operand 0']
    #allocation3 [shape = 's32[2]{0}', space=sflag, size = 0x8, scoped, tag = 'scoped memory for tpu_custom_call.1']
    #allocation4 [shape = 's32[2]{0}', space=sflag, size = 0x8, scoped, tag = 'scoped memory for tpu_custom_call.1']
    #allocation5 [shape = 'u8[98304]{0}', space=vmem, size = 0x18000, scoped, tag = 'input window, operand 1, single buffered']
    #allocation6 [shape = 's32[1]{0}', space=sflag, size = 0x4, scoped, tag = 'scoped memory for tpu_custom_call.1']
    #allocation7 [shape = 'u8[49152]{0}', space=vmem, size = 0xc000, scoped, tag = 'input window, operand 3']
    #allocation8 [shape = 'u8[49152]{0}', space=vmem, size = 0xc000, scoped, tag = 'output window, operand 0']
    %9 = vsyncpa [#allocation3], 0
    %s10 = scalar_lea.sflag [#allocation3], 1
    %11 = vsyncpa %s10, 0
    %12 = vsyncpa [#allocation6], 0
    %13 = vsyncpa [#allocation4], 0
    %s14 = scalar_lea.sflag [#allocation4], 1
    %15 = vsyncpa %s14, 0
    loop: start=0, step=1, limit=5
    $region2: #{tpu_custom_call.1} parent=1 // loop_pre_header
      _
    $region3: #{tpu_custom_call.1} parent=1 // loop_header
      %s17 = sphi 0, %s21
      %p18 = scmp.ge.s32.totalorder %s17, 5
      %s27 = sphi 0, %s29
      %s30 = sphi 0, %s27
      %s31 = sphi 0, %s30
      %s47 = sphi 0, %s31
      %s51 = sphi 0, %s51
      %s53 = sphi 0, %s51
      %s54 = sphi 0, %s53
      %s68 = sphi 0, %s54
      %s72 = sphi 0, %s72
      %s74 = sphi 0, %s72
      %s75 = sphi 0, %s74
      %s89 = sphi 0, %s75
      %s95 = sphi 0, %s97
      %s98 = sphi 0, %s95
      %s99 = sphi 0, %s98
      %s115 = sphi 0, %s99
      %s121 = sphi 0, %s123
      %s124 = sphi 0, %s121
      %s125 = sphi 0, %s124
      %s141 = sphi 0, %s125
    $region4: #{tpu_custom_call.1} parent=1 // loop_header_branch
      %20 = sbr.rel (%p18) target = $region8
    $region5: #{tpu_custom_call.1} parent=1 // loop_body
      %s22 = ssub.s32 %s17, 1
      %s23 = ssub.s32 %s17, 2
      %s24 = sadd.s32 %s17, 1
      %s25 = ssub.s32 %s17, %s24
      %p26 = scmp.eq.s32.totalorder %s25, 0
      %s28 = sadd.s32 %s27, 1
      %s29 = scalar_select %p26, %s27, %s28
      %p32 = pneg %p26
      %p33 = scmp.eq.s32.totalorder %s17, 2
      %p34 = por %p32, %p33
      %p35 = scmp.ne.s32.totalorder %s27, %s30
      %p36 = scmp.eq.s32.totalorder %s17, 0
      %p37 = por %p35, %p36
      %p38 = scmp.ne.s32.totalorder %s27, %s30
      %p39 = scmp.eq.s32.totalorder %s22, 2
      %p40 = por %p38, %p39
      %p41 = scmp.ne.s32.totalorder %s30, %s31
      %p42 = scmp.eq.s32.totalorder %s22, 0
      %p43 = por %p41, %p42
      %p44 = scmp.ne.s32.totalorder %s30, %s31
      %p45 = scmp.eq.s32.totalorder %s23, 2
      %p46 = por %p44, %p45
      %p48 = scmp.ne.s32.totalorder %s31, %s47
      %p49 = scmp.eq.s32.totalorder %s23, 0
      %p50 = por %p48, %p49
      %s52 = sadd.s32 %s51, 1
      %p55 = scmp.eq.s32.totalorder %s17, 2
      %p56 = scmp.ne.s32.totalorder %s51, %s53
      %p57 = scmp.eq.s32.totalorder %s17, 0
      %p58 = por %p56, %p57
      %p59 = scmp.ne.s32.totalorder %s51, %s53
      %p60 = scmp.eq.s32.totalorder %s22, 2
      %p61 = por %p59, %p60
      %p62 = scmp.ne.s32.totalorder %s53, %s54
      %p63 = scmp.eq.s32.totalorder %s22, 0
      %p64 = por %p62, %p63
      %p65 = scmp.ne.s32.totalorder %s53, %s54
      %p66 = scmp.eq.s32.totalorder %s23, 2
      %p67 = por %p65, %p66
      %p69 = scmp.ne.s32.totalorder %s54, %s68
      %p70 = scmp.eq.s32.totalorder %s23, 0
      %p71 = por %p69, %p70
      %s73 = sadd.s32 %s72, 1
      %p76 = scmp.eq.s32.totalorder %s17, 2
      %p77 = scmp.ne.s32.totalorder %s72, %s74
      %p78 = scmp.eq.s32.totalorder %s17, 0
      %p79 = por %p77, %p78
      %p80 = scmp.ne.s32.totalorder %s72, %s74
      %p81 = scmp.eq.s32.totalorder %s22, 2
      %p82 = por %p80, %p81
      %p83 = scmp.ne.s32.totalorder %s74, %s75
      %p84 = scmp.eq.s32.totalorder %s22, 0
      %p85 = por %p83, %p84
      %p86 = scmp.ne.s32.totalorder %s74, %s75
      %p87 = scmp.eq.s32.totalorder %s23, 2
      %p88 = por %p86, %p87
      %p90 = scmp.ne.s32.totalorder %s75, %s89
      %p91 = scmp.eq.s32.totalorder %s23, 0
      %p92 = por %p90, %p91
      %s93 = ssub.s32 %s17, %s24
      %p94 = scmp.eq.s32.totalorder %s93, 0
      %s96 = sadd.s32 %s95, 1
      %s97 = scalar_select %p94, %s95, %s96
      %p100 = pneg %p94
      %p101 = scmp.eq.s32.totalorder %s17, 2
      %p102 = por %p100, %p101
      %p103 = scmp.ne.s32.totalorder %s95, %s98
      %p104 = scmp.eq.s32.totalorder %s17, 0
      %p105 = por %p103, %p104
      %p106 = scmp.ne.s32.totalorder %s95, %s98
      %p107 = scmp.eq.s32.totalorder %s22, 2
      %p108 = por %p106, %p107
      %p109 = scmp.ne.s32.totalorder %s98, %s99
      %p110 = scmp.eq.s32.totalorder %s22, 0
      %p111 = por %p109, %p110
      %p112 = scmp.ne.s32.totalorder %s98, %s99
      %p113 = scmp.eq.s32.totalorder %s23, 2
      %p114 = por %p112, %p113
      %p116 = scmp.ne.s32.totalorder %s99, %s115
      %p117 = scmp.eq.s32.totalorder %s23, 0
      %p118 = por %p116, %p117
      %s119 = ssub.s32 %s17, %s24
      %p120 = scmp.eq.s32.totalorder %s119, 0
      %s122 = sadd.s32 %s121, 1
      %s123 = scalar_select %p120, %s121, %s122
      %p126 = pneg %p120
      %p127 = scmp.eq.s32.totalorder %s17, 2
      %p128 = por %p126, %p127
      %p129 = scmp.ne.s32.totalorder %s121, %s124
      %p130 = scmp.eq.s32.totalorder %s17, 0
      %p131 = por %p129, %p130
      %p132 = scmp.ne.s32.totalorder %s121, %s124
      %p133 = scmp.eq.s32.totalorder %s22, 2
      %p134 = por %p132, %p133
      %p135 = scmp.ne.s32.totalorder %s124, %s125
      %p136 = scmp.eq.s32.totalorder %s22, 0
      %p137 = por %p135, %p136
      %p138 = scmp.ne.s32.totalorder %s124, %s125
      %p139 = scmp.eq.s32.totalorder %s23, 2
      %p140 = por %p138, %p139
      %p142 = scmp.ne.s32.totalorder %s125, %s141
      %p143 = scmp.eq.s32.totalorder %s23, 0
      %p144 = por %p142, %p143
      %p145 = scmp.le.s32.totalorder 1, %s17
      %p146 = scmp.lt.s32.totalorder %s17, 4
      %p147 = pnand %p145, %p146
      %p148 = pneg %p147
      // Predicated region
      $region9: #{tpu_custom_call.1} parent=5 // pred_check
        _
      $region10: #{tpu_custom_call.1} parent=5 // pred_check_branch
        %150 = sbr.rel (%p147) target = $region12
      $region11: #{tpu_custom_call.1} parent=5 // pred_region
        %s151 = ssub.s32 %s17, 1
        // Predicated region
        $region13: #{tpu_custom_call.1} parent=11 // pred_check
          %p152 = pneg %p64
        $region14: #{tpu_custom_call.1} parent=11 // pred_check_branch
          %154 = sbr.rel (%p152) target = $region16
        $region15: #{tpu_custom_call.1} parent=11 // pred_region
          %s156 = ssub.s32 3072, 3072
          %157 = vsyncadd [#allocation6], %s156
          %s158 = sshll.u32 [#allocation5], 4
          %s159 = int_to_ptr.vmem [resolvable:$true] %s158
          %164 = dma.hbm_to_vmem [thread:$0]  %s1, 3072, %s159, [#allocation6], 192, 192, 12
        $region16: #{tpu_custom_call.1} parent=11 // pred_fallthru
          _
        // Predicated region
        $region17: #{tpu_custom_call.1} parent=11 // pred_check
          %p165 = pneg %p85
        $region18: #{tpu_custom_call.1} parent=11 // pred_check_branch
          %167 = sbr.rel (%p165) target = $region20
        $region19: #{tpu_custom_call.1} parent=11 // pred_region
          _
        $region20: #{tpu_custom_call.1} parent=11 // pred_fallthru
          _
      $region12: #{tpu_custom_call.1} parent=5 // pred_fallthru
        _
      %p168 = scmp.lt.s32.totalorder %s17, 3
      // Predicated region
      $region21: #{tpu_custom_call.1} parent=5 // pred_check
        %p169 = pneg %p168
      $region22: #{tpu_custom_call.1} parent=5 // pred_check_branch
        %171 = sbr.rel (%p169) target = $region24
      $region23: #{tpu_custom_call.1} parent=5 // pred_region
        // Predicated region
        $region25: #{tpu_custom_call.1} parent=23 // pred_check
          %p172 = pneg %p37
        $region26: #{tpu_custom_call.1} parent=23 // pred_check_branch
          %174 = sbr.rel (%p172) target = $region28
        $region27: #{tpu_custom_call.1} parent=23 // pred_region
          %s175 = sand.u32 %s17, 1
          %s176 = scalar_lea.sflag [#allocation3], %s175
          %s177 = sand.u32 %s27, 1
          %s178 = smul.addr %s177, 8
          %s179 = scalar_lea.vmem [#allocation2], %s178
          %s180 = smul.u32 2, %s17
          %s182 = ssub.s32 128, 128
          %183 = vsyncadd %s176, %s182
          %s184 = smul.addr %s180, 64
          %s185 = scalar_lea.hbm %s0, %s184
          %s186 = sshll.u32 %s179, 4
          %s187 = int_to_ptr.vmem [resolvable:$true] %s186
          %192 = dma.hbm_to_vmem [thread:$0]  %s185, 128, %s187, %s176, 64, 64, 4
        $region28: #{tpu_custom_call.1} parent=23 // pred_fallthru
          _
        // Predicated region
        $region29: #{tpu_custom_call.1} parent=23 // pred_check
          %p193 = pneg %p105
        $region30: #{tpu_custom_call.1} parent=23 // pred_check_branch
          %195 = sbr.rel (%p193) target = $region32
        $region31: #{tpu_custom_call.1} parent=23 // pred_region
          %s196 = sand.u32 %s17, 1
          %s197 = scalar_lea.sflag [#allocation3], %s196
          %s198 = sand.u32 %s95, 1
          %s199 = smul.addr %s198, 48
          %s200 = scalar_lea.vmem [#allocation7], %s199
          %s201 = smul.u32 2, %s17
          %s203 = ssub.s32 768, 768
          %204 = vsyncadd %s197, %s203
          %s205 = smul.addr %s201, 3
          %s206 = smul.addr %s205, 128
          %s207 = scalar_lea.hbm %s3, %s206
          %s208 = sshll.u32 %s200, 4
          %s209 = int_to_ptr.vmem [resolvable:$true] %s208
          %214 = dma.hbm_to_vmem [thread:$0]  %s207, 768, %s209, %s197, 384, 384, 24
        $region32: #{tpu_custom_call.1} parent=23 // pred_fallthru
          _
      $region24: #{tpu_custom_call.1} parent=5 // pred_fallthru
        _
      %p215 = scmp.le.s32.totalorder 1, %s17
      %p216 = scmp.lt.s32.totalorder %s17, 4
      %p217 = pnand %p215, %p216
      %p218 = pneg %p217
      // Predicated region
      $region33: #{tpu_custom_call.1} parent=5 // pred_check
        _
      $region34: #{tpu_custom_call.1} parent=5 // pred_check_branch
        %220 = sbr.rel (%p217) target = $region36
      $region35: #{tpu_custom_call.1} parent=5 // pred_region
        %s221 = ssub.s32 %s17, 1
        %s222 = sand.u32 %s22, 1
        %s223 = scalar_lea.sflag [#allocation3], %s222
        %s224 = sand.u32 %s30, 1
        %s225 = smul.addr %s224, 8
        %s226 = scalar_lea.vmem [#allocation2], %s225
        // Predicated region
        $region37: #{tpu_custom_call.1} parent=35 // pred_check
          %p227 = pneg %p43
        $region38: #{tpu_custom_call.1} parent=35 // pred_check_branch
          %229 = sbr.rel (%p227) target = $region40
        $region39: #{tpu_custom_call.1} parent=35 // pred_region
          %230 = dma.done %s223, 128
        $region40: #{tpu_custom_call.1} parent=35 // pred_fallthru
          _
        // Predicated region
        $region41: #{tpu_custom_call.1} parent=35 // pred_check
          %p231 = pneg %p64
        $region42: #{tpu_custom_call.1} parent=35 // pred_check_branch
          %233 = sbr.rel (%p231) target = $region44
        $region43: #{tpu_custom_call.1} parent=35 // pred_region
          %234 = dma.done [#allocation6], 3072
        $region44: #{tpu_custom_call.1} parent=35 // pred_fallthru
          _
        %s235 = sand.u32 %s22, 1
        %s236 = scalar_lea.sflag [#allocation3], %s235
        %s237 = sand.u32 %s98, 1
        %s238 = smul.addr %s237, 48
        %s239 = scalar_lea.vmem [#allocation7], %s238
        // Predicated region
        $region45: #{tpu_custom_call.1} parent=35 // pred_check
          %p240 = pneg %p111
        $region46: #{tpu_custom_call.1} parent=35 // pred_check_branch
          %242 = sbr.rel (%p240) target = $region48
        $region47: #{tpu_custom_call.1} parent=35 // pred_region
          %243 = dma.done %s236, 768
        $region48: #{tpu_custom_call.1} parent=35 // pred_fallthru
          _
        %s244 = sand.u32 %s22, 1
        %s245 = scalar_lea.sflag [#allocation3], %s244
        %s246 = sand.u32 %s30, 1
        %s247 = smul.addr %s246, 8
        %s248 = scalar_lea.vmem [#allocation2], %s247
        %p249 = pneg %p43
        %p250 = pneg %p40
        %p251 = pneg %p64
        %p252 = pneg %p61
        %p253 = pneg %p85
        %p254 = pneg %p82
        %s255 = sand.u32 %s22, 1
        %s256 = scalar_lea.sflag [#allocation3], %s255
        %s257 = sand.u32 %s98, 1
        %s258 = smul.addr %s257, 48
        %s259 = scalar_lea.vmem [#allocation7], %s258
        %p260 = pneg %p111
        %p261 = pneg %p108
        %p262 = pneg %p137
        %p263 = pneg %p134
        %s264 = sand.u32 %s124, 1
        %s265 = scalar_lea.sflag [#allocation4], %s264
        %s266 = sand.u32 %s124, 1
        %s267 = smul.addr %s266, 48
        %s268 = scalar_lea.vmem [#allocation8], %s267
        %s269 = smul.u32 2, %s22
        %s270 = smul.u32 2, %s22
        %s271 = smul.u32 2, %s22
        %v273 = vld [vmem:[%s226] sm:$0xf]
        %v274 = vld [vmem:[%s226 + $0x4] sm:$0xf]
        %v275 = vld [vmem:[#allocation5] sm:$0xff]
        %v276 = vld [vmem:[#allocation5 + $0x8] sm:$0xf]
        %v277 = vld [vmem:[#allocation5 + $0xc] sm:$0xff]
        %v278 = vld [vmem:[#allocation5 + $0x14] sm:$0xf]
        %v279 = vld [vmem:[#allocation5 + $0x18] sm:$0xff]
        %v280 = vld [vmem:[#allocation5 + $0x20] sm:$0xf]
        %v281 = vld [vmem:[#allocation5 + $0x24] sm:$0xff]
        %v282 = vld [vmem:[#allocation5 + $0x2c] sm:$0xf]
        %v283 = vld [vmem:[#allocation5 + $0x30] sm:$0xff]
        %v284 = vld [vmem:[#allocation5 + $0x38] sm:$0xf]
        %v285 = vld [vmem:[#allocation5 + $0x3c] sm:$0xff]
        %v286 = vld [vmem:[#allocation5 + $0x44] sm:$0xf]
        %v287 = vld [vmem:[#allocation5 + $0x48] sm:$0xff]
        %v288 = vld [vmem:[#allocation5 + $0x50] sm:$0xf]
        %v289 = vld [vmem:[#allocation5 + $0x54] sm:$0xff]
        %v290 = vld [vmem:[#allocation5 + $0x5c] sm:$0xf]
        %v291 = vld [vmem:[#allocation5 + $0x60] sm:$0xff]
        %v292 = vld [vmem:[#allocation5 + $0x68] sm:$0xf]
        %v293 = vld [vmem:[#allocation5 + $0x6c] sm:$0xff]
        %v294 = vld [vmem:[#allocation5 + $0x74] sm:$0xf]
        %v295 = vld [vmem:[#allocation5 + $0x78] sm:$0xff]
        %v296 = vld [vmem:[#allocation5 + $0x80] sm:$0xf]
        %v297 = vld [vmem:[#allocation5 + $0x84] sm:$0xff]
        %v298 = vld [vmem:[#allocation5 + $0x8c] sm:$0xf]
        %v299 = vld [vmem:[#allocation5 + $0x90] sm:$0xff]
        %v300 = vld [vmem:[#allocation5 + $0x98] sm:$0xf]
        %v301 = vld [vmem:[#allocation5 + $0x9c] sm:$0xff]
        %v302 = vld [vmem:[#allocation5 + $0xa4] sm:$0xf]
        %v303 = vld [vmem:[#allocation5 + $0xa8] sm:$0xff]
        %v304 = vld [vmem:[#allocation5 + $0xb0] sm:$0xf]
        %v305 = vld [vmem:[#allocation5 + $0xb4] sm:$0xff]
        %v306 = vld [vmem:[#allocation5 + $0xbc] sm:$0xf]
        %v307 = vld [vmem:[%s2] sm:$0x7]
        %v309 = vlaneseq
        %v310 = vshrl.u32 %v309, 7
        %v311 = vsub.s32 0, %v310
        %v312 = vrot.slane %v307, %v311
        %v313 = vlaneseq
        %v314 = vshrl.u32 %v313, 7
        %v315 = vsub.s32 1, %v314
        %v316 = vrot.slane %v307, %v315
        %v317 = vlaneseq
        %v318 = vshrl.u32 %v317, 7
        %v319 = vsub.s32 2, %v318
        %v320 = vrot.slane %v307, %v319
        %v326 = vunpack.c.l.b16 %v273
        %v327 = vunpack.c.l.b16 %v274
        %v328 = vpack.c.b16 %v327, %v326
        %v362 = vunpack.c.l.b16 %v275
        %v363 = vunpack.c.h.b16 %v275
        %v364 = vunpack.c.l.b16 %v276
        %v365 = vunpack.c.l.b16 %v277
        %v366 = vunpack.c.h.b16 %v277
        %v367 = vunpack.c.l.b16 %v278
        %v368 = vunpack.c.l.b16 %v279
        %v369 = vunpack.c.h.b16 %v279
        %v370 = vunpack.c.l.b16 %v280
        %v371 = vunpack.c.l.b16 %v281
        %v372 = vunpack.c.h.b16 %v281
        %v373 = vunpack.c.l.b16 %v282
        %v374 = vunpack.c.l.b16 %v283
        %v375 = vunpack.c.h.b16 %v283
        %v376 = vunpack.c.l.b16 %v284
        %v377 = vunpack.c.l.b16 %v285
        %v378 = vunpack.c.h.b16 %v285
        %v379 = vunpack.c.l.b16 %v286
        %v380 = vunpack.c.l.b16 %v287
        %v381 = vunpack.c.h.b16 %v287
        %v382 = vunpack.c.l.b16 %v288
        %v383 = vunpack.c.l.b16 %v289
        %v384 = vunpack.c.h.b16 %v289
        %v385 = vunpack.c.l.b16 %v290
        %v386 = vunpack.c.l.b16 %v291
        %v387 = vunpack.c.h.b16 %v291
        %v388 = vunpack.c.l.b16 %v292
        %v389 = vunpack.c.l.b16 %v293
        %v390 = vunpack.c.h.b16 %v293
        %v391 = vunpack.c.l.b16 %v294
        %v392 = vunpack.c.l.b16 %v295
        %v393 = vunpack.c.h.b16 %v295
        %v394 = vunpack.c.l.b16 %v296
        %v395 = vunpack.c.l.b16 %v297
        %v396 = vunpack.c.h.b16 %v297
        %v397 = vunpack.c.l.b16 %v298
        %v398 = vunpack.c.l.b16 %v299
        %v399 = vunpack.c.h.b16 %v299
        %v400 = vunpack.c.l.b16 %v300
        %v401 = vunpack.c.l.b16 %v301
        %v402 = vunpack.c.h.b16 %v301
        %v403 = vunpack.c.l.b16 %v302
        %v404 = vunpack.c.l.b16 %v303
        %v405 = vunpack.c.h.b16 %v303
        %v406 = vunpack.c.l.b16 %v304
        %v407 = vunpack.c.l.b16 %v305
        %v408 = vunpack.c.h.b16 %v305
        %v409 = vunpack.c.l.b16 %v306
        %v410 = vpack.c.b16 %v365, %v362
        %v411 = vpack.c.b16 %v366, %v363
        %v412 = vpack.c.b16 %v367, %v364
        %v413 = vpack.c.b16 %v371, %v368
        %v414 = vpack.c.b16 %v372, %v369
        %v415 = vpack.c.b16 %v373, %v370
        %v416 = vpack.c.b16 %v377, %v374
        %v417 = vpack.c.b16 %v378, %v375
        %v418 = vpack.c.b16 %v379, %v376
        %v419 = vpack.c.b16 %v383, %v380
        %v420 = vpack.c.b16 %v384, %v381
        %v421 = vpack.c.b16 %v385, %v382
        %v422 = vpack.c.b16 %v389, %v386
        %v423 = vpack.c.b16 %v390, %v387
        %v424 = vpack.c.b16 %v391, %v388
        %v425 = vpack.c.b16 %v395, %v392
        %v426 = vpack.c.b16 %v396, %v393
        %v427 = vpack.c.b16 %v397, %v394
        %v428 = vpack.c.b16 %v401, %v398
        %v429 = vpack.c.b16 %v402, %v399
        %v430 = vpack.c.b16 %v403, %v400
        %v431 = vpack.c.b16 %v407, %v404
        %v432 = vpack.c.b16 %v408, %v405
        %v433 = vpack.c.b16 %v409, %v406
        %458 = vmatprep.subr.bf16.mxu0 %v411
        %459 = vmatpush1.bf16.msra.mxu0 %v410
        %460 = vmatprep.subr.bf16.mxu0 %v414
        %461 = vmatpush1.bf16.msra.mxu0 %v413
        %462 = vmatprep.subr.bf16.mxu0 %v417
        %463 = vmatpush1.bf16.msra.mxu0 %v416
        %464 = vmatprep.subr.bf16.mxu0 %v420
        %465 = vmatpush1.bf16.msra.mxu0 %v419
        %466 = vmatprep.subr.bf16.mxu0 %v423
        %467 = vmatpush1.bf16.msra.mxu0 %v422
        %468 = vmatprep.subr.bf16.mxu0 %v426
        %469 = vmatpush1.bf16.msra.mxu0 %v425
        %470 = vmatprep.subr.bf16.mxu0 %v429
        %471 = vmatpush1.bf16.msra.mxu0 %v428
        %472 = vmatprep.subr.bf16.mxu0 %v432
        %473 = vmatpush1.bf16.msra.mxu0 %v431
        %474 = vmatprep.subr.bf16.mxu0 0
        %475 = vmatpush1.bf16.msra.mxu0 0
        %476 = vmatprep.subr.bf16.mxu0 0
        %477 = vmatpush1.bf16.msra.mxu0 0
        %478 = vmatprep.subr.bf16.mxu0 0
        %479 = vmatpush1.bf16.msra.mxu0 0
        %480 = vmatprep.subr.bf16.mxu0 0
        %481 = vmatpush1.bf16.msra.mxu0 0
        %482 = vmatprep.subr.bf16.mxu0 0
        %483 = vmatpush1.bf16.msra.mxu0 0
        %484 = vmatprep.subr.bf16.mxu0 0
        %485 = vmatpush1.bf16.msra.mxu0 0
        %486 = vmatprep.subr.bf16.mxu0 0
        %487 = vmatpush1.bf16.msra.mxu0 0
        %488 = vmatprep.subr.bf16.mxu0 0
        %489 = vmatpush1.bf16.msra.mxu0 0
        %490 = vmatprep.mubr.bf16.mxu0 0
        %491 = vmatmul.mubr.bf16.gmra.mrb[0].mxu0 %v328
        %v492 = vpop.f32.mrb[0].mxu0
        %v493 = vadd.f32 %v312, %v492
        %v494 = vpop.f32.mrb[0].mxu0
        %v495 = vadd.f32 %v316, %v494
        %v496 = vpop.f32.mrb[0].mxu0
        %v497 = vadd.f32 %v312, %v496
        %v498 = vpop.f32.mrb[0].mxu0
        %v499 = vadd.f32 %v316, %v498
        %500 = vdwg.mxu0
        %501 = vmatprep.subr.bf16.mxu0 0
        %502 = vmatpush1.bf16.msra.mxu0 %v412
        %503 = vmatprep.subr.bf16.mxu0 0
        %504 = vmatpush1.bf16.msra.mxu0 %v415
        %505 = vmatprep.subr.bf16.mxu0 0
        %506 = vmatpush1.bf16.msra.mxu0 %v418
        %507 = vmatprep.subr.bf16.mxu0 0
        %508 = vmatpush1.bf16.msra.mxu0 %v421
        %509 = vmatprep.subr.bf16.mxu0 0
        %510 = vmatpush1.bf16.msra.mxu0 %v424
        %511 = vmatprep.subr.bf16.mxu0 0
        %512 = vmatpush1.bf16.msra.mxu0 %v427
        %513 = vmatprep.subr.bf16.mxu0 0
        %514 = vmatpush1.bf16.msra.mxu0 %v430
        %515 = vmatprep.subr.bf16.mxu0 0
        %516 = vmatpush1.bf16.msra.mxu0 %v433
        %517 = vmatprep.subr.bf16.mxu0 0
        %518 = vmatpush1.bf16.msra.mxu0 0
        %519 = vmatprep.subr.bf16.mxu0 0
        %520 = vmatpush1.bf16.msra.mxu0 0
        %521 = vmatprep.subr.bf16.mxu0 0
        %522 = vmatpush1.bf16.msra.mxu0 0
        %523 = vmatprep.subr.bf16.mxu0 0
        %524 = vmatpush1.bf16.msra.mxu0 0
        %525 = vmatprep.subr.bf16.mxu0 0
        %526 = vmatpush1.bf16.msra.mxu0 0
        %527 = vmatprep.subr.bf16.mxu0 0
        %528 = vmatpush1.bf16.msra.mxu0 0
        %529 = vmatprep.subr.bf16.mxu0 0
        %530 = vmatpush1.bf16.msra.mxu0 0
        %531 = vmatprep.subr.bf16.mxu0 0
        %532 = vmatpush1.bf16.msra.mxu0 0
        %533 = vmatprep.mubr.bf16.mxu0 0
        %534 = vmatmul.mubr.bf16.gmra.mrb[0].mxu0 %v328
        %v535 = vpop.f32.mrb[0].mxu0
        %v536 = vadd.f32 %v320, %v535
        %v537 = vpop.f32.mrb[0].mxu0
        %v538 = vpop.f32.mrb[0].mxu0
        %v539 = vadd.f32 %v320, %v538
        %v540 = vpop.f32.mrb[0].mxu0
        %541 = vdwg.mxu0
        %v542 = vld [vmem:[%s239] sm:$0xff]
        %v543 = vld [vmem:[%s239 + $0x8] sm:$0xff]
        %v544 = vld [vmem:[%s239 + $0x10] sm:$0xff]
        %v545 = vld [vmem:[%s239 + $0x18] sm:$0xff]
        %v546 = vld [vmem:[%s239 + $0x20] sm:$0xff]
        %v547 = vld [vmem:[%s239 + $0x28] sm:$0xff]
        %v548 = vadd.f32 %v493, %v542
        %v549 = vadd.f32 %v495, %v543
        %v550 = vadd.f32 %v536, %v544
        %v551 = vadd.f32 %v497, %v545
        %v552 = vadd.f32 %v499, %v546
        %v553 = vadd.f32 %v539, %v547
        %v554 = vmax.f32 %v548, 0.0
        %v555 = vmax.f32 %v549, 0.0
        %v556 = vmax.f32 %v550, 0.0
        %v557 = vmax.f32 %v551, 0.0
        %v558 = vmax.f32 %v552, 0.0
        %v559 = vmax.f32 %v553, 0.0
        %560 = vst [vmem:[%s268] sm:$0xff] %v554
        %561 = vst [vmem:[%s268 + $0x8] sm:$0xff] %v555
        %562 = vst [vmem:[%s268 + $0x10] sm:$0xff] %v556
        %563 = vst [vmem:[%s268 + $0x18] sm:$0xff] %v557
        %564 = vst [vmem:[%s268 + $0x20] sm:$0xff] %v558
        %565 = vst [vmem:[%s268 + $0x28] sm:$0xff] %v559
        %s566 = sand.u32 %s124, 1
        %s567 = scalar_lea.sflag [#allocation4], %s566
        %s568 = sand.u32 %s124, 1
        %s569 = smul.addr %s568, 48
        %s570 = scalar_lea.vmem [#allocation8], %s569
        // Predicated region
        $region49: #{tpu_custom_call.1} parent=35 // pred_check
          %p571 = pneg %p134
        $region50: #{tpu_custom_call.1} parent=35 // pred_check_branch
          %573 = sbr.rel (%p571) target = $region52
        $region51: #{tpu_custom_call.1} parent=35 // pred_region
          %s574 = smul.u32 2, %s22
          %s576 = ssub.s32 768, 768
          %577 = vsyncadd %s567, %s576
          %s578 = smul.addr %s574, 3
          %s579 = smul.addr %s578, 128
          %s580 = scalar_lea.hbm %s4, %s579
          %s581 = sshll.u32 %s570, 4
          %s582 = int_to_ptr.vmem [resolvable:$true] %s581
          %587 = dma.vmem_to_hbm [thread:$0]  %s582, 768, %s580, %s567, 384, 384, 24
        $region52: #{tpu_custom_call.1} parent=35 // pred_fallthru
          _
      $region36: #{tpu_custom_call.1} parent=5 // pred_fallthru
        _
      %p588 = scmp.le.s32.totalorder 2, %s17
      // Predicated region
      $region53: #{tpu_custom_call.1} parent=5 // pred_check
        %p589 = pneg %p588
      $region54: #{tpu_custom_call.1} parent=5 // pred_check_branch
        %591 = sbr.rel (%p589) target = $region56
      $region55: #{tpu_custom_call.1} parent=5 // pred_region
        %s592 = ssub.s32 %s17, 2
        // Predicated region
        $region57: #{tpu_custom_call.1} parent=55 // pred_check
          %p593 = pneg %p140
        $region58: #{tpu_custom_call.1} parent=55 // pred_check_branch
          %595 = sbr.rel (%p593) target = $region60
        $region59: #{tpu_custom_call.1} parent=55 // pred_region
          %s596 = sand.u32 %s125, 1
          %s597 = scalar_lea.sflag [#allocation4], %s596
          %s598 = sand.u32 %s125, 1
          %s599 = smul.addr %s598, 48
          %s600 = scalar_lea.vmem [#allocation8], %s599
          %601 = dma.done %s597, 768
        $region60: #{tpu_custom_call.1} parent=55 // pred_fallthru
          _
      $region56: #{tpu_custom_call.1} parent=5 // pred_fallthru
        _
    $region6: #{tpu_custom_call.1} parent=1 // loop_footer
      %s21 = sadd.s32 1, %s17
    $region7: #{tpu_custom_call.1} parent=1 // loop_footer_branch
      %16 = sbr.rel target = $region3
    $region8: #{tpu_custom_call.1} parent=1 // loop_exit
      _
    %602 = vsyncpa [#allocation3], 1
    %s603 = scalar_lea.sflag [#allocation3], 1
    %604 = vsyncpa %s603, 1
    %605 = vsyncpa [#allocation6], 1
    %606 = vsyncpa [#allocation4], 1
    %s607 = scalar_lea.sflag [#allocation4], 1
    %608 = vsyncpa %s607, 1

</llo_original>
